<compile_context>
chip_gen: v6e
topology: v6e:2x2x1
jax: 0.10.0
libtpu: 0.0.40
codegen_flags: <defaults>
</compile_context>

<pallas_src>
import math

import jax
import jax.numpy as jnp
from jax.experimental import pallas as pl
from jax.experimental.pallas import tpu as pltpu


def _copy_kernel(x_ref, o_ref):
    # Straight lane-dense copy; no in-kernel reshape / relayout.
    o_ref[...] = x_ref[...]


def _preferred_sublane(dtype) -> int:
    bits = jnp.dtype(dtype).itemsize * 8
    # 8 sublanes per vreg for 32-bit; sub-32-bit dtypes pack along sublanes.
    return max(8, 256 // bits)


def _pick_view(total: int, sub_pref: int):
    """Pick a lane-dense 2-D view (rows, cols, row_tile_multiple) of the flat
    buffer, or None if `total` is not 128-divisible."""
    if total <= 0 or total % 128 != 0:
        return None
    max_cols = min(total, 16384)
    # Prefer rows % sub_pref == 0 (fully packed vregs), then rows % 8 == 0
    # (minimum sublane tile), scanning cols from widest down.
    for row_mult in (sub_pref, 8):
        c = (max_cols // 128) * 128
        while c >= 128:
            if total % c == 0 and (total // c) % row_mult == 0:
                return (total // c, c, row_mult)
            c -= 128
    # 128-divisible but no sublane-aligned row count: widest 128-multiple
    # divisor; rows will be taken as one full block (exempt from (8,128)).
    c = (max_cols // 128) * 128
    while c >= 128:
        if total % c == 0:
            return (total // c, c, None)
        c -= 128
    return None  # unreachable (c == 128 always divides total here)


def flatten(x):
    """Pallas equivalent of torch Flatten: (B, ...) -> (B, prod(rest))."""
    B = x.shape[0]
    feat = int(math.prod(x.shape[1:])) if x.ndim > 1 else 1
    total = B * feat
    dt = x.dtype
    dsize = jnp.dtype(dt).itemsize

    x2d = x.reshape(B, feat)  # contiguous reshape: metadata-only in HBM

    view = _pick_view(total, _preferred_sublane(dt))
    if view is None:
        # Element count not 128-divisible: single whole-array block (block
        # dims == full array dims, so the (8,128) rule does not apply).
        # Only hits small / odd shapes.
        return pl.pallas_call(
            _copy_kernel,
            out_shape=jax.ShapeDtypeStruct((B, feat), dt),
        )(x2d)

    rows, cols, row_mult = view
    flat = x2d.reshape(rows, cols)  # still metadata-only (contiguous)

    # --- row tile: largest aligned divisor of rows within a ~2 MiB budget ---
    tile_budget_bytes = 2 * 1024 * 1024
    if row_mult is None:
        tm = rows  # full rows dim in one block (exempt from sublane rule)
    else:
        max_tm = max(row_mult,
                     (tile_budget_bytes // (cols * dsize)) // row_mult * row_mult)
        tm = row_mult
        d = row_mult
        limit = min(rows, max_tm)
        while d <= limit:
            if rows % d == 0:
                tm = d
            d += row_mult

    grid = (rows // tm,)
    out2d = pl.pallas_call(
        _copy_kernel,
        out_shape=jax.ShapeDtypeStruct((rows, cols), dt),
        grid=grid,
        in_specs=[pl.BlockSpec((tm, cols), lambda i: (i, 0))],
        out_specs=pl.BlockSpec((tm, cols), lambda i: (i, 0)),
        compiler_params=pltpu.CompilerParams(
            dimension_semantics=("parallel",),   # shards across v7x's 2 TCs
            vmem_limit_bytes=32 * 1024 * 1024,   # headroom; safe on all chips
        ),
    )(flat)
    return out2d.reshape(B, feat)


if __name__ == "__main__":
    key = jax.random.PRNGKey(0)
    B, C, H, W = 2, 4, 16, 16
    x = jax.random.normal(key, (B, C, H, W), dtype=jnp.float32)

    out = flatten(x)
    jax.block_until_ready(out)

    # Correctness check against plain JAX reshape (same semantics as torch).
    ref = x.reshape(B, -1)
    assert out.shape == (B, C * H * W), out.shape
    assert out.dtype == x.dtype
    assert jnp.array_equal(out, ref), "mismatch vs reference reshape"

    print("KERNEL_OK")
</pallas_src>

<mosaic_0001>
module attributes {stable_mosaic.version = 11 : i64} {
  func.func @_copy_kernel(%arg0: i32, %arg1: memref<8x256xf32, #tpu.memory_space<vmem>>, %arg2: memref<8x256xf32, #tpu.memory_space<vmem>>) attributes {dimension_semantics = [#tpu.dimension_semantics<parallel>], iteration_bounds = array<i64: 1>, scalar_prefetch = 0 : i64, scratch_operands = 0 : i64, tpu.core_type = #tpu.core_type<tc>, window_params = [{transform_indices = @transform_0, window_bounds = array<i64: 8, 256>}, {transform_indices = @transform_1, window_bounds = array<i64: 8, 256>}]} {
    %c0 = arith.constant 0 : index
    %c0_0 = arith.constant 0 : index
    %0 = vector.load %arg1[%c0, %c0_0] : memref<8x256xf32, #tpu.memory_space<vmem>>, vector<8x256xf32>
    %c0_1 = arith.constant 0 : index
    %c0_2 = arith.constant 0 : index
    %1 = vector.load %arg2[%c0_1, %c0_2] : memref<8x256xf32, #tpu.memory_space<vmem>>, vector<8x256xf32>
    tpu.vector_store %arg2[%c0_1, %c0_2], %0 {strides = array<i32>} : memref<8x256xf32, #tpu.memory_space<vmem>>, vector<8x256xf32>,
    return
  }
  func.func @transform_0(%arg0: i32) -> (i32, i32) {
    %c0_i32 = arith.constant 0 : i32
    %c0_i32_0 = arith.constant 0 : i32
    return %arg0, %c0_i32 : i32, i32
  }
  func.func @transform_1(%arg0: i32) -> (i32, i32) {
    %c0_i32 = arith.constant 0 : i32
    %c0_i32_0 = arith.constant 0 : i32
    return %arg0, %c0_i32 : i32, i32
  }
}

</mosaic_0001>

<llo_original>
// kernel: tpu_custom_call.1
$region0: #{tpu_custom_call.1}
  #allocation0 [shape = 'u32[]', space=smem, size = 0x4, offset = 0x4, fixed_abs, tag = 'smem constant byte address 0x4 - core index']
  #allocation1 [shape = 'u32[144,128]{1,0:T(1,128)}', space=vmem, size = 0x12000, scoped, tag = 'internal scratch']
  %s0 = inlined_call_operand.hbm [shape: f32[8,256], index: 0, kind: input, shape index: {}]
  %s1 = inlined_call_operand.hbm [shape: f32[8,256], index: 1, kind: output, shape index: {}]
  %s2 = sld [smem:[#allocation0]]
  $region18: #{tpu_custom_call.1} parent=0
    _
  %s4 = ssub.s32 1, %s2
  %s5 = scalar_select 0, %s4, %s2
  $region1: #{tpu_custom_call.1} parent=0
    #allocation2 [shape = 'u8[8192]{0}', space=vmem, size = 0x2000, scoped, tag = 'input window, operand 0, single buffered']
    #allocation3 [shape = 's32[1]{0}', space=sflag, size = 0x4, scoped, tag = 'scoped memory for tpu_custom_call.1']
    #allocation4 [shape = 's32[1]{0}', space=sflag, size = 0x4, scoped, tag = 'scoped memory for tpu_custom_call.1']
    #allocation5 [shape = 'u8[8192]{0}', space=vmem, size = 0x2000, scoped, tag = 'output window, operand 0, single buffered']
    %6 = vsyncpa [#allocation3], 0
    %7 = vsyncpa [#allocation4], 0
    // Predicated region
    $region2: #{tpu_custom_call.1} parent=1 // pred_check
      _
    $region3: #{tpu_custom_call.1} parent=1 // pred_check_branch
      %9 = sbr.rel (0) target = $region5
    $region4: #{tpu_custom_call.1} parent=1 // pred_region
      %s11 = ssub.s32 256, 256
      %12 = vsyncadd [#allocation3], %s11
      %s14 = sshll.u32 [#allocation2], 4
      %s15 = int_to_ptr.vmem [resolvable:$true] %s14
      %17 = dma.hbm_to_vmem [thread:$0]  %s0, 256, %s15, [#allocation3]
    $region5: #{tpu_custom_call.1} parent=1 // pred_fallthru
      _
    // Predicated region
    $region6: #{tpu_custom_call.1} parent=1 // pred_check
      _
    $region7: #{tpu_custom_call.1} parent=1 // pred_check_branch
      %19 = sbr.rel (0) target = $region9
    $region8: #{tpu_custom_call.1} parent=1 // pred_region
      %20 = dma.done [#allocation3], 256
    $region9: #{tpu_custom_call.1} parent=1 // pred_fallthru
      _
    %v21 = vld [vmem:[#allocation2] sm:$0xff]
    %v22 = vld [vmem:[#allocation2 + $0x8] sm:$0xff]
    %23 = vst [vmem:[#allocation5] sm:$0xff] %v21
    %24 = vst [vmem:[#allocation5 + $0x8] sm:$0xff] %v22
    // Predicated region
    $region10: #{tpu_custom_call.1} parent=1 // pred_check
      _
    $region11: #{tpu_custom_call.1} parent=1 // pred_check_branch
      %26 = sbr.rel (0) target = $region13
    $region12: #{tpu_custom_call.1} parent=1 // pred_region
      %s28 = ssub.s32 256, 256
      %29 = vsyncadd [#allocation4], %s28
      %s31 = sshll.u32 [#allocation5], 4
      %s32 = int_to_ptr.vmem [resolvable:$true] %s31
      %34 = dma.vmem_to_hbm [thread:$0]  %s32, 256, %s1, [#allocation4]
    $region13: #{tpu_custom_call.1} parent=1 // pred_fallthru
      _
    // Predicated region
    $region14: #{tpu_custom_call.1} parent=1 // pred_check
      _
    $region15: #{tpu_custom_call.1} parent=1 // pred_check_branch
      %36 = sbr.rel (0) target = $region17
    $region16: #{tpu_custom_call.1} parent=1 // pred_region
      %37 = dma.done [#allocation4], 256
    $region17: #{tpu_custom_call.1} parent=1 // pred_fallthru
      _
    %38 = vsyncpa [#allocation3], 1
    %39 = vsyncpa [#allocation4], 1

</llo_original>
